<compile_context>
chip_gen: v6e
topology: v6e:2x2x1
jax: 0.10.0
libtpu: 0.0.40
codegen_flags: <defaults>
</compile_context>

<pallas_src>
import functools
import math

import jax
import jax.numpy as jnp
from jax import lax
from jax.experimental import pallas as pl
from jax.experimental.pallas import tpu as pltpu

EPS = 1e-5                       # nn.LayerNorm default
VMEM_LIMIT = 48 * 1024 * 1024    # conservative: fits v7x's 64 MiB physical VMEM

# Default tile sizes (clamped to the actual dims in the wrappers).
TM, TN, TK, TKV = 256, 512, 512, 512


def _tile(dim, target):
    t = min(dim, target)
    assert dim % t == 0, f"dim {dim} must be a multiple of tile {t}"
    return t


# ---------------------------------------------------------------------------
# 1) Fused QKV projection: tiled matmul, bias at K-finalize
# ---------------------------------------------------------------------------
def _qkv_proj_kernel(x_ref, w_ref, b_ref, o_ref, acc_ref):
    k = pl.program_id(2)

    @pl.when(k == 0)
    def _():
        acc_ref[...] = jnp.zeros(acc_ref.shape, jnp.float32)

    acc_ref[...] += jnp.dot(x_ref[...].astype(jnp.bfloat16), w_ref[...],
                            preferred_element_type=jnp.float32)

    @pl.when(k == pl.num_programs(2) - 1)
    def _():
        o_ref[...] = (acc_ref[...] + b_ref[...]).astype(o_ref.dtype)


def qkv_projection(x, w_t, b, *, out_dtype=jnp.bfloat16):
    """x: (M, K) f32; w_t: (K, N) bf16 (pre-transposed); b: (N,) f32."""
    M, K = x.shape
    N = w_t.shape[1]
    tm, tn, tk = _tile(M, TM), _tile(N, TN), _tile(K, TK)
    grid = (pl.cdiv(M, tm), pl.cdiv(N, tn), pl.cdiv(K, tk))
    return pl.pallas_call(
        _qkv_proj_kernel,
        out_shape=jax.ShapeDtypeStruct((M, N), out_dtype),
        grid=grid,
        in_specs=[
            pl.BlockSpec((tm, tk), lambda i, j, k: (i, k)),
            pl.BlockSpec((tk, tn), lambda i, j, k: (k, j)),
            pl.BlockSpec((1, tn), lambda i, j, k: (0, j)),
        ],
        out_specs=pl.BlockSpec((tm, tn), lambda i, j, k: (i, j)),
        scratch_shapes=[pltpu.VMEM((tm, tn), jnp.float32)],
        compiler_params=pltpu.CompilerParams(
            dimension_semantics=("parallel", "parallel", "arbitrary"),
            vmem_limit_bytes=VMEM_LIMIT),
    )(x, w_t, b.reshape(1, N))


# ---------------------------------------------------------------------------
# 2) Flash-style self-attention over the packed (B, S, 3D) qkv tensor
# ---------------------------------------------------------------------------
def _attention_kernel(q_ref, k_ref, v_ref, o_ref, m_scr, l_scr, acc_scr, *, nhead):
    kv = pl.program_id(1)
    S, D = q_ref.shape[1], q_ref.shape[2]
    hd = D // nhead

    @pl.when(kv == 0)
    def _():
        m_scr[...] = jnp.full(m_scr.shape, -jnp.inf, jnp.float32)
        l_scr[...] = jnp.zeros(l_scr.shape, jnp.float32)
        acc_scr[...] = jnp.zeros(acc_scr.shape, jnp.float32)

    q = q_ref[0]      # (S,  D) bf16 — softmax scale already folded into weights
    k = k_ref[0]      # (Tk, D) bf16
    v = v_ref[0]      # (Tk, D) bf16

    # Per-head online softmax. Head split is done in-kernel because head_dim is
    # typically < 128 lanes, which a BlockSpec last-dim slice cannot express.
    for h in range(nhead):
        sl = slice(h * hd, (h + 1) * hd)
        s = lax.dot_general(q[:, sl], k[:, sl],
                            (((1,), (1,)), ((), ())),
                            preferred_element_type=jnp.float32)        # (S, Tk)
        m_prev = m_scr[:, h:h + 1]
        m_new = jnp.maximum(m_prev, jnp.max(s, axis=-1, keepdims=True))
        alpha = jnp.exp(m_prev - m_new)
        p = jnp.exp(s - m_new)
        l_scr[:, h:h + 1] = alpha * l_scr[:, h:h + 1] + jnp.sum(p, axis=-1,
                                                                keepdims=True)
        acc_scr[:, sl] = alpha * acc_scr[:, sl] + jnp.dot(
            p.astype(v.dtype), v[:, sl], preferred_element_type=jnp.float32)
        m_scr[:, h:h + 1] = m_new

    @pl.when(kv == pl.num_programs(1) - 1)
    def _():
        inv_l = pl.reciprocal(l_scr[...], approx=True)                 # (S, H)
        heads = [acc_scr[:, h * hd:(h + 1) * hd] * inv_l[:, h:h + 1]
                 for h in range(nhead)]
        o_ref[0] = jnp.concatenate(heads, axis=-1).astype(o_ref.dtype)


def attention(qkv, nhead):
    """qkv: (B, S, 3D) bf16 with q|k|v concatenated on the last dim (D % 128 == 0)."""
    B, S, D3 = qkv.shape
    D = D3 // 3
    tkv = _tile(S, TKV)
    grid = (B, pl.cdiv(S, tkv))
    kernel = functools.partial(_attention_kernel, nhead=nhead)
    return pl.pallas_call(
        kernel,
        out_shape=jax.ShapeDtypeStruct((B, S, D), jnp.bfloat16),
        grid=grid,
        in_specs=[
            pl.BlockSpec((1, S, D), lambda b, kv: (b, 0, 0)),     # q slice
            pl.BlockSpec((1, tkv, D), lambda b, kv: (b, kv, 1)),  # k tile
            pl.BlockSpec((1, tkv, D), lambda b, kv: (b, kv, 2)),  # v tile
        ],
        out_specs=pl.BlockSpec((1, S, D), lambda b, kv: (b, 0, 0)),
        scratch_shapes=[
            pltpu.VMEM((S, nhead), jnp.float32),   # running max  (per head)
            pltpu.VMEM((S, nhead), jnp.float32),   # running sum  (per head)
            pltpu.VMEM((S, D), jnp.float32),       # running PV accumulator
        ],
        compiler_params=pltpu.CompilerParams(
            dimension_semantics=("parallel", "arbitrary"),
            vmem_limit_bytes=VMEM_LIMIT),
    )(qkv, qkv, qkv)


# ---------------------------------------------------------------------------
# 3) out_proj + residual + LayerNorm1 (fused epilogue over a K-tiled matmul)
# ---------------------------------------------------------------------------
def _matmul_res_ln_kernel(x_ref, w_ref, b_ref, r_ref, g_ref, beta_ref,
                          o_ref, acc_ref):
    k = pl.program_id(1)

    @pl.when(k == 0)
    def _():
        acc_ref[...] = jnp.zeros(acc_ref.shape, jnp.float32)

    acc_ref[...] += jnp.dot(x_ref[...].astype(jnp.bfloat16), w_ref[...],
                            preferred_element_type=jnp.float32)

    @pl.when(k == pl.num_programs(1) - 1)
    def _():
        y = acc_ref[...] + b_ref[...] + r_ref[...].astype(jnp.float32)
        mu = jnp.mean(y, axis=-1, keepdims=True)
        var = jnp.mean(jnp.square(y - mu), axis=-1, keepdims=True)
        yn = (y - mu) * lax.rsqrt(var + EPS)
        o_ref[...] = (yn * g_ref[...] + beta_ref[...]).astype(o_ref.dtype)


def matmul_residual_layernorm(x, w_t, b, resid, gamma, beta):
    """LayerNorm(resid + x @ w_t + b); w_t is (K, N) bf16, N kept fully resident."""
    M, K = x.shape
    N = w_t.shape[1]
    tm, tk = _tile(M, TM), _tile(K, TK)
    grid = (pl.cdiv(M, tm), pl.cdiv(K, tk))
    return pl.pallas_call(
        _matmul_res_ln_kernel,
        out_shape=jax.ShapeDtypeStruct((M, N), jnp.float32),
        grid=grid,
        in_specs=[
            pl.BlockSpec((tm, tk), lambda i, k: (i, k)),   # x tile
            pl.BlockSpec((tk, N), lambda i, k: (k, 0)),    # weight strip
            pl.BlockSpec((1, N), lambda i, k: (0, 0)),     # bias
            pl.BlockSpec((tm, N), lambda i, k: (i, 0)),    # residual rows
            pl.BlockSpec((1, N), lambda i, k: (0, 0)),     # LN gamma
            pl.BlockSpec((1, N), lambda i, k: (0, 0)),     # LN beta
        ],
        out_specs=pl.BlockSpec((tm, N), lambda i, k: (i, 0)),
        scratch_shapes=[pltpu.VMEM((tm, N), jnp.float32)],
        compiler_params=pltpu.CompilerParams(
            dimension_semantics=("parallel", "arbitrary"),
            vmem_limit_bytes=VMEM_LIMIT),
    )(x, w_t, b.reshape(1, N), resid, gamma.reshape(1, N), beta.reshape(1, N))


# ---------------------------------------------------------------------------
# 4) linear1 + ReLU + linear2 + residual + LayerNorm2, fused, M-tiled
# ---------------------------------------------------------------------------
def _ffn_res_ln_kernel(x_ref, w1_ref, b1_ref, w2_ref, b2_ref, g_ref, beta_ref,
                       o_ref):
    x = x_ref[...]                                   # (tm, D) f32 — also residual
    h = jnp.dot(x.astype(jnp.bfloat16), w1_ref[...],
                preferred_element_type=jnp.float32) + b1_ref[...]
    h = jnp.maximum(h, 0.0)                          # ReLU
    y = jnp.dot(h.astype(jnp.bfloat16), w2_ref[...],
                preferred_element_type=jnp.float32) + b2_ref[...]
    y = y + x                                        # residual add
    mu = jnp.mean(y, axis=-1, keepdims=True)
    var = jnp.mean(jnp.square(y - mu), axis=-1, keepdims=True)
    yn = (y - mu) * lax.rsqrt(var + EPS)
    o_ref[...] = (yn * g_ref[...] + beta_ref[...]).astype(o_ref.dtype)


def ffn_residual_layernorm(x, w1_t, b1, w2_t, b2, gamma, beta):
    M, D = x.shape
    FF = w1_t.shape[1]
    tm = _tile(M, TM)
    grid = (pl.cdiv(M, tm),)
    # TODO(synk): for very large dim_feedforward, tile the FF contraction with an
    # inner pipelined loop instead of keeping both bf16 weights fully VMEM-resident.
    return pl.pallas_call(
        _ffn_res_ln_kernel,
        out_shape=jax.ShapeDtypeStruct((M, D), jnp.float32),
        grid=grid,
        in_specs=[
            pl.BlockSpec((tm, D), lambda i: (i, 0)),    # x (matmul input + residual)
            pl.BlockSpec((D, FF), lambda i: (0, 0)),    # W1 (K, N) bf16, resident
            pl.BlockSpec((1, FF), lambda i: (0, 0)),    # b1
            pl.BlockSpec((FF, D), lambda i: (0, 0)),    # W2 (K, N) bf16, resident
            pl.BlockSpec((1, D), lambda i: (0, 0)),     # b2
            pl.BlockSpec((1, D), lambda i: (0, 0)),     # LN gamma
            pl.BlockSpec((1, D), lambda i: (0, 0)),     # LN beta
        ],
        out_specs=pl.BlockSpec((tm, D), lambda i: (i, 0)),
        compiler_params=pltpu.CompilerParams(
            dimension_semantics=("parallel",),
            vmem_limit_bytes=VMEM_LIMIT),
    )(x, w1_t, b1.reshape(1, FF), w2_t, b2.reshape(1, D),
      gamma.reshape(1, D), beta.reshape(1, D))


# ---------------------------------------------------------------------------
# Full layer (Pallas-backed)
# ---------------------------------------------------------------------------
def transformer_encoder_layer(x, p):
    """x: (B, S, D) f32, batch_first layout. Eval mode (dropout = identity)."""
    B, S, D = x.shape
    H = p["nhead"]
    hd = D // H
    M = B * S
    scale = 1.0 / math.sqrt(hd)

    # One-time weight prep: PyTorch (out,in) -> (in,out); bf16 for the MXU;
    # softmax 1/sqrt(hd) folded into the q slice of the input projection.
    qkv_scale = jnp.concatenate(
        [jnp.full((D,), scale, jnp.float32), jnp.ones((2 * D,), jnp.float32)])
    w_qkv = (p["in_proj_w"].T.astype(jnp.float32)
             * qkv_scale[None, :]).astype(jnp.bfloat16)
    b_qkv = p["in_proj_b"].astype(jnp.float32) * qkv_scale
    w_out = p["out_proj_w"].T.astype(jnp.bfloat16)
    w1 = p["w1"].T.astype(jnp.bfloat16)
    w2 = p["w2"].T.astype(jnp.bfloat16)

    x2 = x.reshape(M, D)

    # 1) fused QKV projection -> (M, 3D) bf16
    qkv = qkv_projection(x2, w_qkv, b_qkv)

    # 2) flash-style self-attention (heads sliced inside the kernel)
    attn = attention(qkv.reshape(B, S, 3 * D), H)              # (B, S, D) bf16

    # 3) out_proj + residual + LayerNorm1 (fused epilogue)
    src = matmul_residual_layernorm(attn.reshape(M, D), w_out, p["out_proj_b"],
                                    x2, p["ln1_g"], p["ln1_b"])

    # 4) linear1 + ReLU + linear2 + residual + LayerNorm2 (fused)
    out = ffn_residual_layernorm(src, w1, p["b1"], w2, p["b2"],
                                 p["ln2_g"], p["ln2_b"])

    # TODO(synk): attn_mask / key_padding_mask and training-mode dropout are not
    # implemented (module default None path / eval mode only).
    return out.reshape(B, S, D)


# ---------------------------------------------------------------------------
# Pure-JAX f32 reference (for a sanity check)
# ---------------------------------------------------------------------------
def reference_layer(x, p):
    B, S, D = x.shape
    H = p["nhead"]
    hd = D // H
    scale = 1.0 / math.sqrt(hd)

    qkv = x @ p["in_proj_w"].T + p["in_proj_b"]
    q, k, v = jnp.split(qkv, 3, axis=-1)

    def sh(t):
        return t.reshape(B, S, H, hd).transpose(0, 2, 1, 3)

    q, k, v = sh(q) * scale, sh(k), sh(v)
    s = jnp.einsum("bhqd,bhkd->bhqk", q, k)
    a = jnp.einsum("bhqk,bhkd->bhqd", jax.nn.softmax(s, axis=-1), v)
    a = a.transpose(0, 2, 1, 3).reshape(B, S, D)
    a = a @ p["out_proj_w"].T + p["out_proj_b"]

    def ln(y, g, b):
        mu = jnp.mean(y, -1, keepdims=True)
        var = jnp.mean((y - mu) ** 2, -1, keepdims=True)
        return (y - mu) * lax.rsqrt(var + EPS) * g + b

    src = ln(x + a, p["ln1_g"], p["ln1_b"])
    ff = jnp.maximum(src @ p["w1"].T + p["b1"], 0.0) @ p["w2"].T + p["b2"]
    return ln(src + ff, p["ln2_g"], p["ln2_b"])


# ---------------------------------------------------------------------------
if __name__ == "__main__":
    B, S, D, H, FF = 2, 16, 128, 4, 256

    key = jax.random.PRNGKey(0)
    ks = jax.random.split(key, 8)

    params = {
        "nhead": H,
        "in_proj_w": 0.02 * jax.random.normal(ks[0], (3 * D, D), jnp.float32),
        "in_proj_b": 0.01 * jax.random.normal(ks[1], (3 * D,), jnp.float32),
        "out_proj_w": 0.02 * jax.random.normal(ks[2], (D, D), jnp.float32),
        "out_proj_b": jnp.zeros((D,), jnp.float32),
        "w1": 0.02 * jax.random.normal(ks[3], (FF, D), jnp.float32),
        "b1": 0.01 * jax.random.normal(ks[4], (FF,), jnp.float32),
        "w2": 0.02 * jax.random.normal(ks[5], (D, FF), jnp.float32),
        "b2": 0.01 * jax.random.normal(ks[6], (D,), jnp.float32),
        "ln1_g": jnp.ones((D,), jnp.float32),
        "ln1_b": jnp.zeros((D,), jnp.float32),
        "ln2_g": jnp.ones((D,), jnp.float32),
        "ln2_b": jnp.zeros((D,), jnp.float32),
    }

    x = jax.random.normal(ks[7], (B, S, D), jnp.float32)

    out = jax.block_until_ready(transformer_encoder_layer(x, params))
    ref = reference_layer(x, params)

    assert out.shape == (B, S, D)
    # bf16 MXU operands + approximate reciprocal -> compare loosely vs f32 reference
    max_diff = jnp.max(jnp.abs(out - ref))
    assert jnp.allclose(out, ref, atol=3e-2, rtol=3e-2), (
        f"mismatch vs JAX reference, max abs diff = {max_diff}")

    print("KERNEL_OK")
</pallas_src>

<mosaic_0001>
module attributes {stable_mosaic.version = 11 : i64} {
  func.func @_qkv_proj_kernel(%arg0: i32, %arg1: i32, %arg2: i32, %arg3: memref<32x128xf32, #tpu.memory_space<vmem>>, %arg4: memref<128x384xbf16, #tpu.memory_space<vmem>>, %arg5: memref<1x384xf32, #tpu.memory_space<vmem>>, %arg6: memref<32x384xbf16, #tpu.memory_space<vmem>>, %arg7: memref<32x384xf32, #tpu.memory_space<vmem>>) attributes {dimension_semantics = [#tpu.dimension_semantics<parallel>, #tpu.dimension_semantics<parallel>, #tpu.dimension_semantics<arbitrary>], iteration_bounds = array<i64: 1, 1, 1>, scalar_prefetch = 0 : i64, scratch_operands = 1 : i64, tpu.core_type = #tpu.core_type<tc>, window_params = [{transform_indices = @transform_0, window_bounds = array<i64: 32, 128>}, {transform_indices = @transform_1, window_bounds = array<i64: 128, 384>}, {transform_indices = @transform_2, window_bounds = array<i64: 1, 384>}, {transform_indices = @transform_3, window_bounds = array<i64: 32, 384>}]} {
    %c0_i32 = arith.constant 0 : i32
    %0 = arith.cmpi eq, %arg2, %c0_i32 : i32
    %1 = arith.extui %0 : i1 to i32
    %c0_i32_0 = arith.constant 0 : i32
    %2 = arith.cmpi ne, %1, %c0_i32_0 : i32
    scf.if %2 {
      %cst_10 = arith.constant 0.000000e+00 : f32
      %13 = vector.broadcast %cst_10 : f32 to vector<32x384xf32>
      %c0_11 = arith.constant 0 : index
      %c0_12 = arith.constant 0 : index
      %14 = vector.load %arg7[%c0_11, %c0_12] : memref<32x384xf32, #tpu.memory_space<vmem>>, vector<32x384xf32>
      tpu.vector_store %arg7[%c0_11, %c0_12], %13 {strides = array<i32>} : memref<32x384xf32, #tpu.memory_space<vmem>>, vector<32x384xf32>,
    } else {
    }
    %c0 = arith.constant 0 : index
    %c0_1 = arith.constant 0 : index
    %3 = vector.load %arg7[%c0, %c0_1] : memref<32x384xf32, #tpu.memory_space<vmem>>, vector<32x384xf32>
    %c0_2 = arith.constant 0 : index
    %c0_3 = arith.constant 0 : index
    %4 = vector.load %arg3[%c0_2, %c0_3] : memref<32x128xf32, #tpu.memory_space<vmem>>, vector<32x128xf32>
    %5 = arith.truncf %4 : vector<32x128xf32> to vector<32x128xbf16>
    %c0_4 = arith.constant 0 : index
    %c0_5 = arith.constant 0 : index
    %6 = vector.load %arg4[%c0_4, %c0_5] : memref<128x384xbf16, #tpu.memory_space<vmem>>, vector<128x384xbf16>
    %cst = arith.constant dense<0.000000e+00> : vector<32x384xf32>
    %7 = tpu.matmul %5, %6, %cst {dimension_numbers = #tpu.dot_dimension_numbers<[1], [0], [0], [1], [0, 0, 1, 1], [], []>} : vector<32x128xbf16>, vector<128x384xbf16>, vector<32x384xf32> -> vector<32x384xf32>
    %8 = arith.addf %3, %7 : vector<32x384xf32>
    %c0_6 = arith.constant 0 : index
    %c0_7 = arith.constant 0 : index
    %9 = vector.load %arg7[%c0_6, %c0_7] : memref<32x384xf32, #tpu.memory_space<vmem>>, vector<32x384xf32>
    tpu.vector_store %arg7[%c0_6, %c0_7], %8 {strides = array<i32>} : memref<32x384xf32, #tpu.memory_space<vmem>>, vector<32x384xf32>,
    %c0_i32_8 = arith.constant 0 : i32
    %10 = arith.cmpi eq, %arg2, %c0_i32_8 : i32
    %11 = arith.extui %10 : i1 to i32
    %c0_i32_9 = arith.constant 0 : i32
    %12 = arith.cmpi ne, %11, %c0_i32_9 : i32
    scf.if %12 {
      %c0_10 = arith.constant 0 : index
      %c0_11 = arith.constant 0 : index
      %13 = vector.load %arg7[%c0_10, %c0_11] : memref<32x384xf32, #tpu.memory_space<vmem>>, vector<32x384xf32>
      %c0_12 = arith.constant 0 : index
      %c0_13 = arith.constant 0 : index
      %14 = vector.load %arg5[%c0_12, %c0_13] : memref<1x384xf32, #tpu.memory_space<vmem>>, vector<1x384xf32>
      %15 = vector.broadcast %14 : vector<1x384xf32> to vector<32x384xf32>
      %16 = arith.addf %13, %15 : vector<32x384xf32>
      %17 = arith.truncf %16 : vector<32x384xf32> to vector<32x384xbf16>
      %c0_14 = arith.constant 0 : index
      %c0_15 = arith.constant 0 : index
      %18 = vector.load %arg6[%c0_14, %c0_15] : memref<32x384xbf16, #tpu.memory_space<vmem>>, vector<32x384xbf16>
      tpu.vector_store %arg6[%c0_14, %c0_15], %17 {strides = array<i32>} : memref<32x384xbf16, #tpu.memory_space<vmem>>, vector<32x384xbf16>,
    } else {
    }
    return
  }
  func.func @transform_0(%arg0: i32, %arg1: i32, %arg2: i32) -> (i32, i32) {
    %c0_i32 = arith.constant 0 : i32
    return %arg0, %arg2 : i32, i32
  }
  func.func @transform_1(%arg0: i32, %arg1: i32, %arg2: i32) -> (i32, i32) {
    %c0_i32 = arith.constant 0 : i32
    return %arg2, %arg1 : i32, i32
  }
  func.func @transform_2(%arg0: i32, %arg1: i32, %arg2: i32) -> (i32, i32) {
    %c0_i32 = arith.constant 0 : i32
    %c0_i32_0 = arith.constant 0 : i32
    return %c0_i32, %arg1 : i32, i32
  }
  func.func @transform_3(%arg0: i32, %arg1: i32, %arg2: i32) -> (i32, i32) {
    %c0_i32 = arith.constant 0 : i32
    return %arg0, %arg1 : i32, i32
  }
}

</mosaic_0001>

<llo_original>
// kernel: tpu_custom_call.1
$region0: #{tpu_custom_call.1}
  #allocation0 [shape = 'u32[]', space=smem, size = 0x4, offset = 0x4, fixed_abs, tag = 'smem constant byte address 0x4 - core index']
  #allocation1 [shape = 'u32[144,128]{1,0:T(1,128)}', space=vmem, size = 0x12000, scoped, tag = 'internal scratch']
  #allocation2 [shape = 'f32[32,384]{1,0:T(8,128)}', space=vmem, size = 0xc000, scoped, tag = 'scratch operand']
  %s0 = inlined_call_operand.hbm [shape: f32[32,128], index: 0, kind: input, shape index: {}]
  %s1 = inlined_call_operand.hbm [shape: bf16[128,384], index: 1, kind: input, shape index: {}]
  %s2 = inlined_call_operand.vmem [shape: f32[1,384], index: 2, kind: input, shape index: {}]
  %s3 = inlined_call_operand.hbm [shape: bf16[32,384], index: 3, kind: output, shape index: {}]
  %s4 = sld [smem:[#allocation0]]
  $region38: #{tpu_custom_call.1} parent=0
    _
  %s6 = ssub.s32 1, %s4
  %s7 = scalar_select 0, %s6, %s4
  $region1: #{tpu_custom_call.1} parent=0
    #allocation3 [shape = 'u8[16384]{0}', space=vmem, size = 0x4000, scoped, tag = 'input window, operand 0, single buffered']
    #allocation4 [shape = 's32[1]{0}', space=sflag, size = 0x4, scoped, tag = 'scoped memory for tpu_custom_call.1']
    #allocation5 [shape = 's32[1]{0}', space=sflag, size = 0x4, scoped, tag = 'scoped memory for tpu_custom_call.1']
    #allocation6 [shape = 'u8[98304]{0}', space=vmem, size = 0x18000, scoped, tag = 'input window, operand 1, single buffered']
    #allocation7 [shape = 's32[1]{0}', space=sflag, size = 0x4, scoped, tag = 'scoped memory for tpu_custom_call.1']
    #allocation8 [shape = 'u8[24576]{0}', space=vmem, size = 0x6000, scoped, tag = 'output window, operand 0, single buffered']
    %8 = vsyncpa [#allocation4], 0
    %9 = vsyncpa [#allocation7], 0
    %10 = vsyncpa [#allocation5], 0
    // Predicated region
    $region2: #{tpu_custom_call.1} parent=1 // pred_check
      _
    $region3: #{tpu_custom_call.1} parent=1 // pred_check_branch
      %12 = sbr.rel (0) target = $region5
    $region4: #{tpu_custom_call.1} parent=1 // pred_region
      %s14 = ssub.s32 512, 512
      %15 = vsyncadd [#allocation4], %s14
      %s16 = sshll.u32 [#allocation3], 4
      %s17 = int_to_ptr.vmem [resolvable:$true] %s16
      %22 = dma.hbm_to_vmem [thread:$0]  %s0, 512, %s17, [#allocation4], 128, 128, 8
    $region5: #{tpu_custom_call.1} parent=1 // pred_fallthru
      _
    // Predicated region
    $region6: #{tpu_custom_call.1} parent=1 // pred_check
      _
    $region7: #{tpu_custom_call.1} parent=1 // pred_check_branch
      %24 = sbr.rel (0) target = $region9
    $region8: #{tpu_custom_call.1} parent=1 // pred_region
      %s26 = ssub.s32 3072, 3072
      %27 = vsyncadd [#allocation7], %s26
      %s28 = sshll.u32 [#allocation6], 4
      %s29 = int_to_ptr.vmem [resolvable:$true] %s28
      %34 = dma.hbm_to_vmem [thread:$0]  %s1, 3072, %s29, [#allocation7], 192, 192, 12
    $region9: #{tpu_custom_call.1} parent=1 // pred_fallthru
      _
    // Predicated region
    $region10: #{tpu_custom_call.1} parent=1 // pred_check
      _
    $region11: #{tpu_custom_call.1} parent=1 // pred_check_branch
      %36 = sbr.rel (0) target = $region13
    $region12: #{tpu_custom_call.1} parent=1 // pred_region
      _
    $region13: #{tpu_custom_call.1} parent=1 // pred_fallthru
      _
    // Predicated region
    $region14: #{tpu_custom_call.1} parent=1 // pred_check
      _
    $region15: #{tpu_custom_call.1} parent=1 // pred_check_branch
      %38 = sbr.rel (0) target = $region17
    $region16: #{tpu_custom_call.1} parent=1 // pred_region
      %39 = dma.done [#allocation4], 512
    $region17: #{tpu_custom_call.1} parent=1 // pred_fallthru
      _
    // Predicated region
    $region18: #{tpu_custom_call.1} parent=1 // pred_check
      _
    $region19: #{tpu_custom_call.1} parent=1 // pred_check_branch
      %41 = sbr.rel (0) target = $region21
    $region20: #{tpu_custom_call.1} parent=1 // pred_region
      %42 = dma.done [#allocation7], 3072
    $region21: #{tpu_custom_call.1} parent=1 // pred_fallthru
      _
    %p44 = scmp.eq.s32.totalorder 0, 0
    // Predicated region
    $region22: #{tpu_custom_call.1} parent=1 // pred_check
      %p45 = pneg %p44
    $region23: #{tpu_custom_call.1} parent=1 // pred_check_branch
      %47 = sbr.rel (%p45) target = $region25
    $region24: #{tpu_custom_call.1} parent=1 // pred_region
      %48 = vst [vmem:[#allocation2] sm:$0xff] 0.0
      %49 = vst [vmem:[#allocation2 + $0x8] sm:$0xff] 0.0
      %50 = vst [vmem:[#allocation2 + $0x10] sm:$0xff] 0.0
      %51 = vst [vmem:[#allocation2 + $0x18] sm:$0xff] 0.0
      %52 = vst [vmem:[#allocation2 + $0x20] sm:$0xff] 0.0
      %53 = vst [vmem:[#allocation2 + $0x28] sm:$0xff] 0.0
      %54 = vst [vmem:[#allocation2 + $0x30] sm:$0xff] 0.0
      %55 = vst [vmem:[#allocation2 + $0x38] sm:$0xff] 0.0
      %56 = vst [vmem:[#allocation2 + $0x40] sm:$0xff] 0.0
      %57 = vst [vmem:[#allocation2 + $0x48] sm:$0xff] 0.0
      %58 = vst [vmem:[#allocation2 + $0x50] sm:$0xff] 0.0
      %59 = vst [vmem:[#allocation2 + $0x58] sm:$0xff] 0.0
    $region25: #{tpu_custom_call.1} parent=1 // pred_fallthru
      _
    %v60 = vld [vmem:[#allocation2] sm:$0xff]
    %v61 = vld [vmem:[#allocation2 + $0x8] sm:$0xff]
    %v62 = vld [vmem:[#allocation2 + $0x10] sm:$0xff]
    %v63 = vld [vmem:[#allocation2 + $0x18] sm:$0xff]
    %v64 = vld [vmem:[#allocation2 + $0x20] sm:$0xff]
    %v65 = vld [vmem:[#allocation2 + $0x28] sm:$0xff]
    %v66 = vld [vmem:[#allocation2 + $0x30] sm:$0xff]
    %v67 = vld [vmem:[#allocation2 + $0x38] sm:$0xff]
    %v68 = vld [vmem:[#allocation2 + $0x40] sm:$0xff]
    %v69 = vld [vmem:[#allocation2 + $0x48] sm:$0xff]
    %v70 = vld [vmem:[#allocation2 + $0x50] sm:$0xff]
    %v71 = vld [vmem:[#allocation2 + $0x58] sm:$0xff]
    %v72 = vld [vmem:[#allocation3] sm:$0xff]
    %v73 = vld [vmem:[#allocation3 + $0x8] sm:$0xff]
    %v74 = vld [vmem:[#allocation3 + $0x10] sm:$0xff]
    %v75 = vld [vmem:[#allocation3 + $0x18] sm:$0xff]
    %v76 = vpack.c.bf16 %v73, %v72
    %v77 = vpack.c.bf16 %v75, %v74
    %v78 = vld [vmem:[#allocation6] sm:$0xff]
    %v79 = vld [vmem:[#allocation6 + $0x8] sm:$0xf]
    %v80 = vld [vmem:[#allocation6 + $0xc] sm:$0xff]
    %v81 = vld [vmem:[#allocation6 + $0x14] sm:$0xf]
    %v82 = vld [vmem:[#allocation6 + $0x18] sm:$0xff]
    %v83 = vld [vmem:[#allocation6 + $0x20] sm:$0xf]
    %v84 = vld [vmem:[#allocation6 + $0x24] sm:$0xff]
    %v85 = vld [vmem:[#allocation6 + $0x2c] sm:$0xf]
    %v86 = vld [vmem:[#allocation6 + $0x30] sm:$0xff]
    %v87 = vld [vmem:[#allocation6 + $0x38] sm:$0xf]
    %v88 = vld [vmem:[#allocation6 + $0x3c] sm:$0xff]
    %v89 = vld [vmem:[#allocation6 + $0x44] sm:$0xf]
    %v90 = vld [vmem:[#allocation6 + $0x48] sm:$0xff]
    %v91 = vld [vmem:[#allocation6 + $0x50] sm:$0xf]
    %v92 = vld [vmem:[#allocation6 + $0x54] sm:$0xff]
    %v93 = vld [vmem:[#allocation6 + $0x5c] sm:$0xf]
    %v94 = vld [vmem:[#allocation6 + $0x60] sm:$0xff]
    %v95 = vld [vmem:[#allocation6 + $0x68] sm:$0xf]
    %v96 = vld [vmem:[#allocation6 + $0x6c] sm:$0xff]
    %v97 = vld [vmem:[#allocation6 + $0x74] sm:$0xf]
    %v98 = vld [vmem:[#allocation6 + $0x78] sm:$0xff]
    %v99 = vld [vmem:[#allocation6 + $0x80] sm:$0xf]
    %v100 = vld [vmem:[#allocation6 + $0x84] sm:$0xff]
    %v101 = vld [vmem:[#allocation6 + $0x8c] sm:$0xf]
    %v102 = vld [vmem:[#allocation6 + $0x90] sm:$0xff]
    %v103 = vld [vmem:[#allocation6 + $0x98] sm:$0xf]
    %v104 = vld [vmem:[#allocation6 + $0x9c] sm:$0xff]
    %v105 = vld [vmem:[#allocation6 + $0xa4] sm:$0xf]
    %v106 = vld [vmem:[#allocation6 + $0xa8] sm:$0xff]
    %v107 = vld [vmem:[#allocation6 + $0xb0] sm:$0xf]
    %v108 = vld [vmem:[#allocation6 + $0xb4] sm:$0xff]
    %v109 = vld [vmem:[#allocation6 + $0xbc] sm:$0xf]
    %v142 = vunpack.c.l.b16 %v78
    %v143 = vunpack.c.h.b16 %v78
    %v144 = vunpack.c.l.b16 %v79
    %v145 = vunpack.c.l.b16 %v80
    %v146 = vunpack.c.h.b16 %v80
    %v147 = vunpack.c.l.b16 %v81
    %v148 = vunpack.c.l.b16 %v82
    %v149 = vunpack.c.h.b16 %v82
    %v150 = vunpack.c.l.b16 %v83
    %v151 = vunpack.c.l.b16 %v84
    %v152 = vunpack.c.h.b16 %v84
    %v153 = vunpack.c.l.b16 %v85
    %v154 = vunpack.c.l.b16 %v86
    %v155 = vunpack.c.h.b16 %v86
    %v156 = vunpack.c.l.b16 %v87
    %v157 = vunpack.c.l.b16 %v88
    %v158 = vunpack.c.h.b16 %v88
    %v159 = vunpack.c.l.b16 %v89
    %v160 = vunpack.c.l.b16 %v90
    %v161 = vunpack.c.h.b16 %v90
    %v162 = vunpack.c.l.b16 %v91
    %v163 = vunpack.c.l.b16 %v92
    %v164 = vunpack.c.h.b16 %v92
    %v165 = vunpack.c.l.b16 %v93
    %v166 = vunpack.c.l.b16 %v94
    %v167 = vunpack.c.h.b16 %v94
    %v168 = vunpack.c.l.b16 %v95
    %v169 = vunpack.c.l.b16 %v96
    %v170 = vunpack.c.h.b16 %v96
    %v171 = vunpack.c.l.b16 %v97
    %v172 = vunpack.c.l.b16 %v98
    %v173 = vunpack.c.h.b16 %v98
    %v174 = vunpack.c.l.b16 %v99
    %v175 = vunpack.c.l.b16 %v100
    %v176 = vunpack.c.h.b16 %v100
    %v177 = vunpack.c.l.b16 %v101
    %v178 = vunpack.c.l.b16 %v102
    %v179 = vunpack.c.h.b16 %v102
    %v180 = vunpack.c.l.b16 %v103
    %v181 = vunpack.c.l.b16 %v104
    %v182 = vunpack.c.h.b16 %v104
    %v183 = vunpack.c.l.b16 %v105
    %v184 = vunpack.c.l.b16 %v106
    %v185 = vunpack.c.h.b16 %v106
    %v186 = vunpack.c.l.b16 %v107
    %v187 = vunpack.c.l.b16 %v108
    %v188 = vunpack.c.h.b16 %v108
    %v189 = vunpack.c.l.b16 %v109
    %v190 = vpack.c.b16 %v145, %v142
    %v191 = vpack.c.b16 %v146, %v143
    %v192 = vpack.c.b16 %v147, %v144
    %v193 = vpack.c.b16 %v151, %v148
    %v194 = vpack.c.b16 %v152, %v149
    %v195 = vpack.c.b16 %v153, %v150
    %v196 = vpack.c.b16 %v157, %v154
    %v197 = vpack.c.b16 %v158, %v155
    %v198 = vpack.c.b16 %v159, %v156
    %v199 = vpack.c.b16 %v163, %v160
    %v200 = vpack.c.b16 %v164, %v161
    %v201 = vpack.c.b16 %v165, %v162
    %v202 = vpack.c.b16 %v169, %v166
    %v203 = vpack.c.b16 %v170, %v167
    %v204 = vpack.c.b16 %v171, %v168
    %v205 = vpack.c.b16 %v175, %v172
    %v206 = vpack.c.b16 %v176, %v173
    %v207 = vpack.c.b16 %v177, %v174
    %v208 = vpack.c.b16 %v181, %v178
    %v209 = vpack.c.b16 %v182, %v179
    %v210 = vpack.c.b16 %v183, %v180
    %v211 = vpack.c.b16 %v187, %v184
    %v212 = vpack.c.b16 %v188, %v185
    %v213 = vpack.c.b16 %v189, %v186
    %238 = vmatprep.subr.bf16.mxu0 %v212
    %239 = vmatpush1.bf16.msra.mxu0 %v211
    %240 = vmatprep.subr.bf16.mxu0 %v209
    %241 = vmatpush1.bf16.msra.mxu0 %v208
    %242 = vmatprep.subr.bf16.mxu0 %v206
    %243 = vmatpush1.bf16.msra.mxu0 %v205
    %244 = vmatprep.subr.bf16.mxu0 %v203
    %245 = vmatpush1.bf16.msra.mxu0 %v202
    %246 = vmatprep.subr.bf16.mxu0 %v200
    %247 = vmatpush1.bf16.msra.mxu0 %v199
    %248 = vmatprep.subr.bf16.mxu0 %v197
    %249 = vmatpush1.bf16.msra.mxu0 %v196
    %250 = vmatprep.subr.bf16.mxu0 %v194
    %251 = vmatpush1.bf16.msra.mxu0 %v193
    %252 = vmatprep.subr.bf16.mxu0 %v191
    %253 = vmatpush1.bf16.msra.mxu0 %v190
    %254 = vmatprep.subr.bf16.mxu0 0
    %255 = vmatpush2.bf16.msra.mxu0 0
    %256 = vmatprep.subr.bf16.mxu0 0
    %257 = vmatpush2.bf16.msra.mxu0 0
    %258 = vmatprep.subr.bf16.mxu0 0
    %259 = vmatpush2.bf16.msra.mxu0 0
    %260 = vmatprep.subr.bf16.mxu0 0
    %261 = vmatpush2.bf16.msra.mxu0 0
    %262 = vmatprep.subr.bf16.mxu0 0
    %263 = vmatpush2.bf16.msra.mxu0 0
    %264 = vmatprep.subr.bf16.mxu0 0
    %265 = vmatpush2.bf16.msra.mxu0 0
    %266 = vmatprep.subr.bf16.mxu0 0
    %267 = vmatpush2.bf16.msra.mxu0 0
    %268 = vmatprep.subr.bf16.mxu0 0
    %269 = vmatpush2.bf16.msra.mxu0 0
    %270 = vmatprep.mubr.bf16.mxu0 0
    %271 = vmatmul.mubr.bf16.gmra.mxu0 %v76
    %v272 = vpop.f32.mrf.mxu0
    %v273 = vadd.f32 0.0, %v272
    %v274 = vpop.f32.mrf.mxu0
    %v275 = vadd.f32 0.0, %v274
    %v276 = vpop.f32.mrf.mxu0
    %v277 = vadd.f32 0.0, %v276
    %v278 = vpop.f32.mrf.mxu0
    %v279 = vadd.f32 0.0, %v278
    %280 = vmatprep.mubr.bf16.mxu0 0
    %281 = vmatmul.mubr.bf16.gmra.mxu0 %v77
    %v282 = vpop.f32.mrf.mxu0
    %v283 = vadd.f32 0.0, %v282
    %v284 = vpop.f32.mrf.mxu0
    %v285 = vadd.f32 0.0, %v284
    %v286 = vpop.f32.mrf.mxu0
    %v287 = vadd.f32 0.0, %v286
    %v288 = vpop.f32.mrf.mxu0
    %v289 = vadd.f32 0.0, %v288
    %290 = vdwg.mxu0
    %291 = vmatprep.subr.bf16.mxu0 0
    %292 = vmatpush1.bf16.msra.mxu0 %v213
    %293 = vmatprep.subr.bf16.mxu0 0
    %294 = vmatpush1.bf16.msra.mxu0 %v210
    %295 = vmatprep.subr.bf16.mxu0 0
    %296 = vmatpush1.bf16.msra.mxu0 %v207
    %297 = vmatprep.subr.bf16.mxu0 0
    %298 = vmatpush1.bf16.msra.mxu0 %v204
    %299 = vmatprep.subr.bf16.mxu0 0
    %300 = vmatpush1.bf16.msra.mxu0 %v201
    %301 = vmatprep.subr.bf16.mxu0 0
    %302 = vmatpush1.bf16.msra.mxu0 %v198
    %303 = vmatprep.subr.bf16.mxu0 0
    %304 = vmatpush1.bf16.msra.mxu0 %v195
    %305 = vmatprep.subr.bf16.mxu0 0
    %306 = vmatpush1.bf16.msra.mxu0 %v192
    %307 = vmatprep.subr.bf16.mxu0 0
    %308 = vmatpush2.bf16.msra.mxu0 0
    %309 = vmatprep.subr.bf16.mxu0 0
    %310 = vmatpush2.bf16.msra.mxu0 0
    %311 = vmatprep.subr.bf16.mxu0 0
    %312 = vmatpush2.bf16.msra.mxu0 0
    %313 = vmatprep.subr.bf16.mxu0 0
    %314 = vmatpush2.bf16.msra.mxu0 0
    %315 = vmatprep.subr.bf16.mxu0 0
    %316 = vmatpush2.bf16.msra.mxu0 0
    %317 = vmatprep.subr.bf16.mxu0 0
    %318 = vmatpush2.bf16.msra.mxu0 0
    %319 = vmatprep.subr.bf16.mxu0 0
    %320 = vmatpush2.bf16.msra.mxu0 0
    %321 = vmatprep.subr.bf16.mxu0 0
    %322 = vmatpush2.bf16.msra.mxu0 0
    %323 = vmatprep.mubr.bf16.mxu0 0
    %324 = vmatmul.mubr.bf16.gmra.mxu0 %v76
    %v325 = vpop.f32.mrf.mxu0
    %v326 = vadd.f32 0.0, %v325
    %v327 = vpop.f32.mrf.mxu0
    %v328 = vpop.f32.mrf.mxu0
    %v329 = vadd.f32 0.0, %v328
    %v330 = vpop.f32.mrf.mxu0
    %331 = vmatprep.mubr.bf16.mxu0 0
    %332 = vmatmul.mubr.bf16.gmra.mxu0 %v77
    %v333 = vpop.f32.mrf.mxu0
    %v334 = vadd.f32 0.0, %v333
    %v335 = vpop.f32.mrf.mxu0
    %v336 = vpop.f32.mrf.mxu0
    %v337 = vadd.f32 0.0, %v336
    %v338 = vpop.f32.mrf.mxu0
    %339 = vdwg.mxu0
    %v340 = vadd.f32 %v60, %v273
    %v341 = vadd.f32 %v61, %v275
    %v342 = vadd.f32 %v62, %v326
    %v343 = vadd.f32 %v63, %v277
    %v344 = vadd.f32 %v64, %v279
    %v345 = vadd.f32 %v65, %v329
    %v346 = vadd.f32 %v66, %v283
    %v347 = vadd.f32 %v67, %v285
    %v348 = vadd.f32 %v68, %v334
    %v349 = vadd.f32 %v69, %v287
    %v350 = vadd.f32 %v70, %v289
    %v351 = vadd.f32 %v71, %v337
    %352 = vst [vmem:[#allocation2] sm:$0xff] %v340
    %353 = vst [vmem:[#allocation2 + $0x8] sm:$0xff] %v341
    %354 = vst [vmem:[#allocation2 + $0x10] sm:$0xff] %v342
    %355 = vst [vmem:[#allocation2 + $0x18] sm:$0xff] %v343
    %356 = vst [vmem:[#allocation2 + $0x20] sm:$0xff] %v344
    %357 = vst [vmem:[#allocation2 + $0x28] sm:$0xff] %v345
    %358 = vst [vmem:[#allocation2 + $0x30] sm:$0xff] %v346
    %359 = vst [vmem:[#allocation2 + $0x38] sm:$0xff] %v347
    %360 = vst [vmem:[#allocation2 + $0x40] sm:$0xff] %v348
    %361 = vst [vmem:[#allocation2 + $0x48] sm:$0xff] %v349
    %362 = vst [vmem:[#allocation2 + $0x50] sm:$0xff] %v350
    %363 = vst [vmem:[#allocation2 + $0x58] sm:$0xff] %v351
    // Predicated region
    $region26: #{tpu_custom_call.1} parent=1 // pred_check
      %p364 = pneg %p44
    $region27: #{tpu_custom_call.1} parent=1 // pred_check_branch
      %366 = sbr.rel (%p364) target = $region29
    $region28: #{tpu_custom_call.1} parent=1 // pred_region
      %v367 = vld [vmem:[#allocation2] sm:$0xff]
      %v368 = vld [vmem:[#allocation2 + $0x8] sm:$0xff]
      %v369 = vld [vmem:[#allocation2 + $0x10] sm:$0xff]
      %v370 = vld [vmem:[#allocation2 + $0x18] sm:$0xff]
      %v371 = vld [vmem:[#allocation2 + $0x20] sm:$0xff]
      %v372 = vld [vmem:[#allocation2 + $0x28] sm:$0xff]
      %v373 = vld [vmem:[#allocation2 + $0x30] sm:$0xff]
      %v374 = vld [vmem:[#allocation2 + $0x38] sm:$0xff]
      %v375 = vld [vmem:[#allocation2 + $0x40] sm:$0xff]
      %v376 = vld [vmem:[#allocation2 + $0x48] sm:$0xff]
      %v377 = vld [vmem:[#allocation2 + $0x50] sm:$0xff]
      %v378 = vld [vmem:[#allocation2 + $0x58] sm:$0xff]
      %v379 = vld [vmem:[%s2] sm:$0x7]
      %v381 = vlaneseq
      %v382 = vshrl.u32 %v381, 7
      %v383 = vsub.s32 0, %v382
      %v384 = vrot.slane %v379, %v383
      %v385 = vlaneseq
      %v386 = vshrl.u32 %v385, 7
      %v387 = vsub.s32 1, %v386
      %v388 = vrot.slane %v379, %v387
      %v389 = vlaneseq
      %v390 = vshrl.u32 %v389, 7
      %v391 = vsub.s32 2, %v390
      %v392 = vrot.slane %v379, %v391
      %v396 = vadd.f32 %v367, %v384
      %v397 = vadd.f32 %v368, %v388
      %v398 = vadd.f32 %v369, %v392
      %v399 = vadd.f32 %v370, %v384
      %v400 = vadd.f32 %v371, %v388
      %v401 = vadd.f32 %v372, %v392
      %v402 = vadd.f32 %v373, %v384
      %v403 = vadd.f32 %v374, %v388
      %v404 = vadd.f32 %v375, %v392
      %v405 = vadd.f32 %v376, %v384
      %v406 = vadd.f32 %v377, %v388
      %v407 = vadd.f32 %v378, %v392
      %v408 = vpack.c.bf16 %v399, %v396
      %v409 = vpack.c.bf16 %v400, %v397
      %v410 = vpack.c.bf16 %v401, %v398
      %v411 = vpack.c.bf16 %v405, %v402
      %v412 = vpack.c.bf16 %v406, %v403
      %v413 = vpack.c.bf16 %v407, %v404
      %v420 = vunpack.c.l.b16 %v408
      %v421 = vunpack.c.l.b16 %v409
      %v422 = vunpack.c.l.b16 %v410
      %v423 = vunpack.c.h.b16 %v408
      %v424 = vunpack.c.h.b16 %v409
      %v425 = vunpack.c.h.b16 %v410
      %v426 = vunpack.c.l.b16 %v411
      %v427 = vunpack.c.l.b16 %v412
      %v428 = vunpack.c.l.b16 %v413
      %v429 = vunpack.c.h.b16 %v411
      %v430 = vunpack.c.h.b16 %v412
      %v431 = vunpack.c.h.b16 %v413
      %v432 = vpack.c.b16 %v421, %v420
      %v433 = vpack.c.b16 %v422, %v422
      %v434 = vpack.c.b16 %v424, %v423
      %v435 = vpack.c.b16 %v425, %v425
      %v436 = vpack.c.b16 %v427, %v426
      %v437 = vpack.c.b16 %v428, %v428
      %v438 = vpack.c.b16 %v430, %v429
      %v439 = vpack.c.b16 %v431, %v431
      %448 = vst [vmem:[#allocation8] sm:$0xff] %v432
      %449 = vst [vmem:[#allocation8 + $0x8] sm:$0xf] %v433
      %450 = vst [vmem:[#allocation8 + $0xc] sm:$0xff] %v434
      %451 = vst [vmem:[#allocation8 + $0x14] sm:$0xf] %v435
      %452 = vst [vmem:[#allocation8 + $0x18] sm:$0xff] %v436
      %453 = vst [vmem:[#allocation8 + $0x20] sm:$0xf] %v437
      %454 = vst [vmem:[#allocation8 + $0x24] sm:$0xff] %v438
      %455 = vst [vmem:[#allocation8 + $0x2c] sm:$0xf] %v439
    $region29: #{tpu_custom_call.1} parent=1 // pred_fallthru
      _
    // Predicated region
    $region30: #{tpu_custom_call.1} parent=1 // pred_check
      _
    $region31: #{tpu_custom_call.1} parent=1 // pred_check_branch
      %457 = sbr.rel (0) target = $region33
    $region32: #{tpu_custom_call.1} parent=1 // pred_region
      %s459 = ssub.s32 768, 768
      %460 = vsyncadd [#allocation5], %s459
      %s461 = sshll.u32 [#allocation8], 4
      %s462 = int_to_ptr.vmem [resolvable:$true] %s461
      %467 = dma.vmem_to_hbm [thread:$0]  %s462, 768, %s3, [#allocation5], 192, 192, 12
    $region33: #{tpu_custom_call.1} parent=1 // pred_fallthru
      _
    // Predicated region
    $region34: #{tpu_custom_call.1} parent=1 // pred_check
      _
    $region35: #{tpu_custom_call.1} parent=1 // pred_check_branch
      %469 = sbr.rel (0) target = $region37
    $region36: #{tpu_custom_call.1} parent=1 // pred_region
      %470 = dma.done [#allocation5], 768
    $region37: #{tpu_custom_call.1} parent=1 // pred_fallthru
      _
    %471 = vsyncpa [#allocation4], 1
    %472 = vsyncpa [#allocation7], 1
    %473 = vsyncpa [#allocation5], 1

</llo_original>
